<compile_context>
chip_gen: v7x
topology: tpu7x:2x2x1
jax: 0.10.0
libtpu: 0.0.40
codegen_flags: <defaults>
</compile_context>

<pallas_src>
import math
import numpy as np
import jax
import jax.numpy as jnp
from jax.experimental import pallas as pl
from jax.experimental.pallas import tpu as pltpu

_LANES = 128
_MAX_TILE_ROWS = 512  # 512 * 128 * 4B = 256 KiB per f32 tile


def _bernoulli_kernel(inv_tau_ref, logits_ref, u_ref, z_ref, zhard_ref):
    logits = logits_ref[...]
    u = u_ref[...]

    # torch.distributions.utils.clamp_probs: clamp to [eps, 1 - eps], eps = finfo(f32).eps
    eps = jnp.float32(1.1920929e-07)
    u = jnp.clip(u, eps, jnp.float32(1.0) - eps)

    # Logistic noise with a single log on the EUP: log(u / (1 - u)).
    logistic = jnp.log(u * pl.reciprocal(jnp.float32(1.0) - u, approx=True))

    pre = logits + logistic                       # temperature-free pre-activation
    inv_tau = inv_tau_ref[0]
    z_ref[...] = jax.nn.sigmoid(pre * inv_tau)    # relaxed sample
    # Hard sample from the sign of the pre-activation: tau > 0 and sigmoid is monotone with
    # sigmoid(0) = 0.5, so (pre >= 0) <=> (z >= 0.5); exact even where sigmoid saturates.
    zhard_ref[...] = jnp.where(pre >= jnp.float32(0.0),
                               jnp.float32(1.0), jnp.float32(0.0))


def bernoulli_reparameterize(logits, tau, key):
    """RelaxedBernoulli rsample + hard threshold. Returns (z, z_hard) with logits' shape."""
    orig_shape = logits.shape
    n = int(np.prod(orig_shape))

    # Lane-dense padded layout: [rows_padded, 128], rows_padded a multiple of tile_rows.
    rows = -(-n // _LANES)
    rows8 = ((rows + 7) // 8) * 8
    tile_rows = min(_MAX_TILE_ROWS, rows8)
    rows_padded = ((rows8 + tile_rows - 1) // tile_rows) * tile_rows
    n_padded = rows_padded * _LANES

    flat = jnp.ravel(logits).astype(jnp.float32)
    flat = jnp.pad(flat, (0, n_padded - n))
    x2d = flat.reshape(rows_padded, _LANES)

    # Uniform noise (clamped in-kernel); padded tail is discarded after the call.
    u2d = jax.random.uniform(key, (rows_padded, _LANES), dtype=jnp.float32)

    inv_tau = jnp.asarray([1.0 / float(tau)], dtype=jnp.float32)

    grid = (rows_padded // tile_rows,)
    z2d, zhard2d = pl.pallas_call(
        _bernoulli_kernel,
        out_shape=(jax.ShapeDtypeStruct((rows_padded, _LANES), jnp.float32),
                   jax.ShapeDtypeStruct((rows_padded, _LANES), jnp.float32)),
        grid=grid,
        in_specs=[
            pl.BlockSpec(memory_space=pltpu.MemorySpace.SMEM),      # inv_tau scalar
            pl.BlockSpec((tile_rows, _LANES), lambda i: (i, 0)),    # logits tile
            pl.BlockSpec((tile_rows, _LANES), lambda i: (i, 0)),    # uniform tile
        ],
        out_specs=(
            pl.BlockSpec((tile_rows, _LANES), lambda i: (i, 0)),    # z
            pl.BlockSpec((tile_rows, _LANES), lambda i: (i, 0)),    # z_hard
        ),
        compiler_params=pltpu.CompilerParams(
            dimension_semantics=("parallel",)),
    )(inv_tau, x2d, u2d)

    z = z2d.reshape(-1)[:n].reshape(orig_shape)
    z_hard = zhard2d.reshape(-1)[:n].reshape(orig_shape)
    return z, z_hard


class BernoulliPallas:
    """JAX/Pallas port of the PyTorch Bernoulli reparameterizer module (forward pass)."""

    def __init__(self, config, dim=-1):
        self.dim = dim
        self.iteration = 0
        self.config = config
        self.input_size = config["discrete_size"]
        self.output_size = config["discrete_size"]
        self.training = True
        # anneal params (matches _setup_anneal_params)
        self.min_temp = 0.3
        self.max_temp = 1.0
        self.tau = 1.0
        self.last_epoch = config["epochs"]
        self.clip_min = 1e-08

    def cosine_anneal(self):
        # NOTE: formula kept verbatim from the PyTorch module (the -1/last_epoch constant is
        # iteration-independent there as well); preserving semantics, not "fixing" it.
        if self.training and self.iteration > 0:
            updated_tau = self.min_temp + (self.tau - self.min_temp) * (
                1 + math.cos(math.pi * -1 / self.last_epoch)) / 2
            self.tau = float(np.clip(updated_tau, self.clip_min, self.max_temp))

    def prior(self, batch_size, key):
        # Bernoulli(0.5) prior sample (host-side helper; not part of the kernel hot path).
        return jax.random.bernoulli(
            key, 0.5, (batch_size, self.output_size)).astype(jnp.float32)

    def forward(self, logits, key=None, seed=0):
        self.cosine_anneal()
        if key is None:
            key = jax.random.fold_in(jax.random.PRNGKey(seed), self.iteration)
        z, z_hard = bernoulli_reparameterize(logits, self.tau, key)
        params = {"z_hard": z_hard, "logits": logits, "tau_scalar": self.tau}
        self.iteration += 1
        ret_dict = {"z": z, "logits": logits, "discrete": params}
        if self.training:
            return z, ret_dict
        return z_hard, ret_dict


if __name__ == "__main__":
    # Small shapes consistent with the module: batch=8, discrete_size=32.
    B, D = 8, 32
    config = {"discrete_size": D, "epochs": 10, "cuda": False}

    key = jax.random.PRNGKey(0)
    k_logits, k_noise = jax.random.split(key)
    logits = jax.random.normal(k_logits, (B, D), dtype=jnp.float32)

    module = BernoulliPallas(config)
    z, out = module.forward(logits, key=k_noise)
    z_hard = out["discrete"]["z_hard"]

    jax.block_until_ready(z)
    jax.block_until_ready(z_hard)

    z_np = np.asarray(z)
    zh_np = np.asarray(z_hard)
    assert z_np.shape == (B, D) and zh_np.shape == (B, D)
    assert np.all((z_np >= 0.0) & (z_np <= 1.0))
    assert np.all((zh_np == 0.0) | (zh_np == 1.0))
    # z_hard is the pre-activation sign, which agrees with (z >= 0.5) away from the exact
    # 0.5 rounding boundary.
    away = np.abs(z_np - 0.5) > 1e-6
    assert np.array_equal(zh_np[away], (z_np[away] >= 0.5).astype(np.float32))

    # Second call exercises the annealed-tau path (iteration > 0) and a grid > 1 tiling.
    big_logits = jax.random.normal(jax.random.PRNGKey(1), (128, 1024), dtype=jnp.float32)
    z2, out2 = module.forward(big_logits)
    jax.block_until_ready(z2)
    assert z2.shape == (128, 1024)
    z2_np = np.asarray(z2)
    assert np.all((z2_np >= 0.0) & (z2_np <= 1.0))

    print("KERNEL_OK")
</pallas_src>

<mosaic_0001>
module attributes {stable_mosaic.version = 11 : i64} {
  func.func @_bernoulli_kernel(%arg0: i32, %arg1: memref<1xf32, #tpu.memory_space<smem>>, %arg2: memref<8x128xf32, #tpu.memory_space<vmem>>, %arg3: memref<8x128xf32, #tpu.memory_space<vmem>>, %arg4: memref<8x128xf32, #tpu.memory_space<vmem>>, %arg5: memref<8x128xf32, #tpu.memory_space<vmem>>) attributes {dimension_semantics = [#tpu.dimension_semantics<parallel>], iteration_bounds = array<i64: 1>, scalar_prefetch = 0 : i64, scratch_operands = 0 : i64, tpu.core_type = #tpu.core_type<tc>, window_params = [{transform_indices = @transform_0, window_bounds = array<i64: 1>}, {transform_indices = @transform_1, window_bounds = array<i64: 8, 128>}, {transform_indices = @transform_2, window_bounds = array<i64: 8, 128>}, {transform_indices = @transform_3, window_bounds = array<i64: 8, 128>}, {transform_indices = @transform_4, window_bounds = array<i64: 8, 128>}]} {
    %c0 = arith.constant 0 : index
    %c0_0 = arith.constant 0 : index
    %0 = vector.load %arg2[%c0, %c0_0] : memref<8x128xf32, #tpu.memory_space<vmem>>, vector<8x128xf32>
    %c0_1 = arith.constant 0 : index
    %c0_2 = arith.constant 0 : index
    %1 = vector.load %arg3[%c0_1, %c0_2] : memref<8x128xf32, #tpu.memory_space<vmem>>, vector<8x128xf32>
    %cst = arith.constant 1.000000e+00 : f32
    %cst_3 = arith.constant 1.1920929E-7 : f32
    %2 = arith.subf %cst, %cst_3 : f32
    %cst_4 = arith.constant 1.1920929E-7 : f32
    %3 = vector.broadcast %cst_4 : f32 to vector<8x128xf32>
    %4 = arith.maximumf %3, %1 : vector<8x128xf32>
    %5 = vector.broadcast %2 : f32 to vector<8x128xf32>
    %6 = arith.minimumf %5, %4 : vector<8x128xf32>
    %cst_5 = arith.constant 1.000000e+00 : f32
    %7 = vector.broadcast %cst_5 : f32 to vector<8x128xf32>
    %8 = arith.subf %7, %6 : vector<8x128xf32>
    %9 = tpu.reciprocal %8 {approx = true} : vector<8x128xf32> -> vector<8x128xf32>
    %10 = arith.mulf %6, %9 : vector<8x128xf32>
    %11 = math.log %10 : vector<8x128xf32>
    %12 = arith.addf %0, %11 : vector<8x128xf32>
    %c0_6 = arith.constant 0 : index
    %13 = memref.load %arg1[%c0_6] : memref<1xf32, #tpu.memory_space<smem>>
    %14 = vector.broadcast %13 : f32 to vector<8x128xf32>
    %15 = arith.mulf %12, %14 : vector<8x128xf32>
    %16 = arith.negf %15 : vector<8x128xf32>
    %17 = math.exp %16 : vector<8x128xf32>
    %cst_7 = arith.constant 1.000000e+00 : f32
    %18 = vector.broadcast %cst_7 : f32 to vector<8x128xf32>
    %19 = arith.addf %18, %17 : vector<8x128xf32>
    %20 = arith.divf %18, %19 : vector<8x128xf32>
    %c0_8 = arith.constant 0 : index
    %c0_9 = arith.constant 0 : index
    %21 = vector.load %arg4[%c0_8, %c0_9] : memref<8x128xf32, #tpu.memory_space<vmem>>, vector<8x128xf32>
    tpu.vector_store %arg4[%c0_8, %c0_9], %20 {strides = array<i32>} : memref<8x128xf32, #tpu.memory_space<vmem>>, vector<8x128xf32>,
    %cst_10 = arith.constant 0.000000e+00 : f32
    %22 = vector.broadcast %cst_10 : f32 to vector<8x128xf32>
    %23 = arith.cmpf oge, %12, %22 : vector<8x128xf32>
    %cst_11 = arith.constant 1.000000e+00 : f32
    %cst_12 = arith.constant 0.000000e+00 : f32
    %24 = vector.broadcast %cst_11 : f32 to vector<8x128xf32>
    %25 = vector.broadcast %cst_12 : f32 to vector<8x128xf32>
    %26 = arith.select %23, %24, %25 : vector<8x128xi1>, vector<8x128xf32>
    %c0_13 = arith.constant 0 : index
    %c0_14 = arith.constant 0 : index
    %27 = vector.load %arg5[%c0_13, %c0_14] : memref<8x128xf32, #tpu.memory_space<vmem>>, vector<8x128xf32>
    tpu.vector_store %arg5[%c0_13, %c0_14], %26 {strides = array<i32>} : memref<8x128xf32, #tpu.memory_space<vmem>>, vector<8x128xf32>,
    return
  }
  func.func @transform_0(%arg0: i32) -> i32 {
    %c0_i32 = arith.constant 0 : i32
    %c0_i32_0 = arith.constant 0 : i32
    return %c0_i32 : i32
  }
  func.func @transform_1(%arg0: i32) -> (i32, i32) {
    %c0_i32 = arith.constant 0 : i32
    %c0_i32_0 = arith.constant 0 : i32
    return %arg0, %c0_i32 : i32, i32
  }
  func.func @transform_2(%arg0: i32) -> (i32, i32) {
    %c0_i32 = arith.constant 0 : i32
    %c0_i32_0 = arith.constant 0 : i32
    return %arg0, %c0_i32 : i32, i32
  }
  func.func @transform_3(%arg0: i32) -> (i32, i32) {
    %c0_i32 = arith.constant 0 : i32
    %c0_i32_0 = arith.constant 0 : i32
    return %arg0, %c0_i32 : i32, i32
  }
  func.func @transform_4(%arg0: i32) -> (i32, i32) {
    %c0_i32 = arith.constant 0 : i32
    %c0_i32_0 = arith.constant 0 : i32
    return %arg0, %c0_i32 : i32, i32
  }
}

</mosaic_0001>

<llo_original>
// kernel: tpu_custom_call.1
$region0: #{tpu_custom_call.1}
  #allocation0 [shape = 'u32[]', space=smem, size = 0x4, offset = 0x4, fixed_abs, tag = 'smem constant byte address 0x4 - core index']
  #allocation1 [shape = 'u32[144,128]{1,0:T(1,128)}', space=vmem, size = 0x12000, scoped, tag = 'internal scratch']
  #allocation2 [shape = 'f32[1]{0:T(128)S(6)}', space=smem, size = 0x200, scoped, tag = 'scoped memory for tpu_custom_call.1']
  %s0 = inlined_call_operand.<no memory space> [shape: f32[1], index: 0, kind: input, shape index: {}]
  %s1 = inlined_call_operand.hbm [shape: f32[8,128], index: 1, kind: input, shape index: {}]
  %s2 = inlined_call_operand.hbm [shape: f32[8,128], index: 2, kind: input, shape index: {}]
  %s3 = inlined_call_operand.hbm [shape: f32[8,128], index: 3, kind: output, shape index: {0}]
  %s4 = inlined_call_operand.hbm [shape: f32[8,128], index: 4, kind: output, shape index: {1}]
  %5 = xla_tuple %s3, %s4
  %s6 = sld [smem:[#allocation0]]
  $region38: #{tpu_custom_call.1} parent=0
    _
  %s8 = ssub.s32 1, %s6
  %s9 = scalar_select 0, %s8, %s6
  %10 = sst [smem:[#allocation2]] %s0
  $region1: #{tpu_custom_call.1} parent=0
    #allocation3 [shape = 'u8[4096]{0}', space=vmem, size = 0x1000, scoped, tag = 'input window, operand 1, single buffered']
    #allocation4 [shape = 's32[1]{0}', space=sflag, size = 0x4, scoped, tag = 'scoped memory for tpu_custom_call.1']
    #allocation5 [shape = 's32[1]{0}', space=sflag, size = 0x4, scoped, tag = 'scoped memory for tpu_custom_call.1']
    #allocation6 [shape = 'u8[4096]{0}', space=vmem, size = 0x1000, scoped, tag = 'input window, operand 2, single buffered']
    #allocation7 [shape = 's32[1]{0}', space=sflag, size = 0x4, scoped, tag = 'scoped memory for tpu_custom_call.1']
    #allocation8 [shape = 'u8[4096]{0}', space=vmem, size = 0x1000, scoped, tag = 'output window, operand 0, single buffered']
    #allocation9 [shape = 'u8[4096]{0}', space=vmem, size = 0x1000, scoped, tag = 'output window, operand 1, single buffered']
    #allocation10 [shape = 's32[1]{0}', space=sflag, size = 0x4, scoped, tag = 'scoped memory for tpu_custom_call.1']
    %11 = vsyncpa [#allocation4], 0
    %12 = vsyncpa [#allocation7], 0
    %13 = vsyncpa [#allocation5], 0
    %14 = vsyncpa [#allocation10], 0
    // Predicated region
    $region2: #{tpu_custom_call.1} parent=1 // pred_check
      _
    $region3: #{tpu_custom_call.1} parent=1 // pred_check_branch
      %16 = sbr.rel (0) target = $region5
    $region4: #{tpu_custom_call.1} parent=1 // pred_region
      _
    $region5: #{tpu_custom_call.1} parent=1 // pred_fallthru
      _
    // Predicated region
    $region6: #{tpu_custom_call.1} parent=1 // pred_check
      _
    $region7: #{tpu_custom_call.1} parent=1 // pred_check_branch
      %18 = sbr.rel (0) target = $region9
    $region8: #{tpu_custom_call.1} parent=1 // pred_region
      %s20 = ssub.s32 128, 128
      %21 = vsyncadd [#allocation4], %s20
      %s23 = sshll.u32 [#allocation3], 4
      %s24 = int_to_ptr.vmem [resolvable:$true] %s23
      %26 = dma.hbm_to_vmem [thread:$0]  %s1, 128, %s24, [#allocation4]
    $region9: #{tpu_custom_call.1} parent=1 // pred_fallthru
      _
    // Predicated region
    $region10: #{tpu_custom_call.1} parent=1 // pred_check
      _
    $region11: #{tpu_custom_call.1} parent=1 // pred_check_branch
      %28 = sbr.rel (0) target = $region13
    $region12: #{tpu_custom_call.1} parent=1 // pred_region
      %s30 = ssub.s32 128, 128
      %31 = vsyncadd [#allocation7], %s30
      %s33 = sshll.u32 [#allocation6], 4
      %s34 = int_to_ptr.vmem [resolvable:$true] %s33
      %36 = dma.hbm_to_vmem [thread:$0]  %s2, 128, %s34, [#allocation7]
    $region13: #{tpu_custom_call.1} parent=1 // pred_fallthru
      _
    // Predicated region
    $region14: #{tpu_custom_call.1} parent=1 // pred_check
      _
    $region15: #{tpu_custom_call.1} parent=1 // pred_check_branch
      %38 = sbr.rel (0) target = $region17
    $region16: #{tpu_custom_call.1} parent=1 // pred_region
      %39 = dma.done [#allocation4], 128
    $region17: #{tpu_custom_call.1} parent=1 // pred_fallthru
      _
    // Predicated region
    $region18: #{tpu_custom_call.1} parent=1 // pred_check
      _
    $region19: #{tpu_custom_call.1} parent=1 // pred_check_branch
      %41 = sbr.rel (0) target = $region21
    $region20: #{tpu_custom_call.1} parent=1 // pred_region
      %42 = dma.done [#allocation7], 128
    $region21: #{tpu_custom_call.1} parent=1 // pred_fallthru
      _
    %v43 = vld [vmem:[#allocation3] sm:$0xff]
    %v44 = vld [vmem:[#allocation6] sm:$0xff]
    %v45 = vmax.f32 %v44, 1.1920929e-07
    %v46 = vmin.f32 %v45, 0.9999999
    %v47 = vsub.f32 1.0, %v46
    %v48 = vrcp.pop %v47
    %v49 = vmul.f32 %v46, %v48
    %v50 = vlog2.pop %v49
    %v51 = vmul.f32 %v50, 0.6931472
    %v52 = vadd.f32 %v43, %v51
    %s53 = sld [smem:[#allocation2]]
    %v54 = vstv %s53
    %v55 = vmul.f32 %v52, %v54
    %v56 = vxor.u32 %v55, 2147483648
    %v57 = vmul.f32 %v56, 1.442695
    %v58 = vpow.pop %v57
    %v59 = vadd.f32 %v58, 1.0
    %v60 = vrcp.pop %v59
    %v61 = vmul.f32 1.0, %v60
    %62 = vst [vmem:[#allocation8] sm:$0xff] %v61
    %vm63 = vcmp.ge.f32.partialorder %v52, 0.0
    %v64 = vsel %vm63, 1.0, 0.0
    %65 = vst [vmem:[#allocation9] sm:$0xff] %v64
    // Predicated region
    $region22: #{tpu_custom_call.1} parent=1 // pred_check
      _
    $region23: #{tpu_custom_call.1} parent=1 // pred_check_branch
      %67 = sbr.rel (0) target = $region25
    $region24: #{tpu_custom_call.1} parent=1 // pred_region
      %s69 = ssub.s32 128, 128
      %70 = vsyncadd [#allocation5], %s69
      %s72 = sshll.u32 [#allocation8], 4
      %s73 = int_to_ptr.vmem [resolvable:$true] %s72
      %75 = dma.vmem_to_hbm [thread:$0]  %s73, 128, %s3, [#allocation5]
    $region25: #{tpu_custom_call.1} parent=1 // pred_fallthru
      _
    // Predicated region
    $region26: #{tpu_custom_call.1} parent=1 // pred_check
      _
    $region27: #{tpu_custom_call.1} parent=1 // pred_check_branch
      %77 = sbr.rel (0) target = $region29
    $region28: #{tpu_custom_call.1} parent=1 // pred_region
      %s79 = ssub.s32 128, 128
      %80 = vsyncadd [#allocation10], %s79
      %s82 = sshll.u32 [#allocation9], 4
      %s83 = int_to_ptr.vmem [resolvable:$true] %s82
      %85 = dma.vmem_to_hbm [thread:$0]  %s83, 128, %s4, [#allocation10]
    $region29: #{tpu_custom_call.1} parent=1 // pred_fallthru
      _
    // Predicated region
    $region30: #{tpu_custom_call.1} parent=1 // pred_check
      _
    $region31: #{tpu_custom_call.1} parent=1 // pred_check_branch
      %87 = sbr.rel (0) target = $region33
    $region32: #{tpu_custom_call.1} parent=1 // pred_region
      %88 = dma.done [#allocation5], 128
    $region33: #{tpu_custom_call.1} parent=1 // pred_fallthru
      _
    // Predicated region
    $region34: #{tpu_custom_call.1} parent=1 // pred_check
      _
    $region35: #{tpu_custom_call.1} parent=1 // pred_check_branch
      %90 = sbr.rel (0) target = $region37
    $region36: #{tpu_custom_call.1} parent=1 // pred_region
      %91 = dma.done [#allocation10], 128
    $region37: #{tpu_custom_call.1} parent=1 // pred_fallthru
      _
    %92 = vsyncpa [#allocation4], 1
    %93 = vsyncpa [#allocation7], 1
    %94 = vsyncpa [#allocation5], 1
    %95 = vsyncpa [#allocation10], 1

</llo_original>
